<compile_context>
chip_gen: v6e
topology: v6e:2x2x1
jax: 0.10.0
libtpu: 0.0.40
codegen_flags: <defaults>
</compile_context>

<pallas_src>
import functools
import math

import jax
import jax.numpy as jnp
import numpy as np
from jax import lax
from jax.experimental import pallas as pl
from jax.experimental.pallas import tpu as pltpu


def _round_up(x, m):
    return ((x + m - 1) // m) * m


# ------------------------------------------------------------------------------------
# Kernel 1: row-tiled shared-statistics reduction.
# ------------------------------------------------------------------------------------
def _stats_kernel(xq_ref, xs_ref, wq_ref, bq_ref, wk_ref, bk_ref, wv_ref, bv_ref,
                  kvs_ref, ksum_ref, qn_ref, kn_ref, *,
                  n_valid, n_rows_total, tile, tiles_per_partial):
    f32 = jnp.float32
    p = pl.program_id(0)
    r = pl.program_id(1)

    @pl.when(r == 0)
    def _():
        kvs_ref[...] = jnp.zeros_like(kvs_ref)
        ksum_ref[...] = jnp.zeros_like(ksum_ref)
        qn_ref[...] = jnp.zeros_like(qn_ref)
        kn_ref[...] = jnp.zeros_like(kn_ref)

    # Hot-path MXU matmuls with f32 accumulation (operands may be bf16 on v6e/v7x).
    q = jnp.dot(xq_ref[...], wq_ref[...], preferred_element_type=f32) + bq_ref[...]
    k = jnp.dot(xs_ref[...], wk_ref[...], preferred_element_type=f32) + bk_ref[...]
    v = jnp.dot(xs_ref[...], wv_ref[...], preferred_element_type=f32) + bv_ref[...]

    # Zero rows that only exist because of row padding (the bias would leak into the
    # norms / kvs / ksum).  v needs no masking: it only enters through the masked K.
    if n_valid < n_rows_total:                                # static Python check
        row0 = (p * tiles_per_partial + r) * tile
        row_id = row0 + lax.broadcasted_iota(jnp.int32, (tile, 1), 0)
        valid = row_id < n_valid
        q = jnp.where(valid, q, 0.0)
        k = jnp.where(valid, k, 0.0)

    qn_ref[...] += jnp.sum(q * q)
    kn_ref[...] += jnp.sum(k * k)
    ksum_ref[...] += jnp.sum(k, axis=0, keepdims=True)
    # K^T V with the transpose folded into the MXU operand feed (contract dim 0 / 0).
    kvs_ref[...] += lax.dot_general(k, v, (((0,), (0,)), ((), ())),
                                    preferred_element_type=f32)


# ------------------------------------------------------------------------------------
# Epilogue: combine partial accumulators, apply the deferred Frobenius scale and the
# per-head block-diagonal mask, emit the fused kernel-2 operand W = [kvs_scaled | D].
# ------------------------------------------------------------------------------------
def _combine_kernel(kvs_ref, ksum_ref, qn_ref, kn_ref, mask_ref, w_ref):
    f32 = jnp.float32
    hmp = mask_ref.shape[0]
    kvs = jnp.sum(kvs_ref[...], axis=0)            # (HMp, HMp)
    ksum = jnp.sum(ksum_ref[...], axis=0)          # (1, HMp)
    # Deferred normalisation: 1/(||q||_F * ||k||_F) on the EUP rsqrt path.
    # NOTE: an all-zero Q or K gives inf/NaN here, exactly like the PyTorch reference.
    scale = lax.rsqrt(jnp.sum(qn_ref[...])) * lax.rsqrt(jnp.sum(kn_ref[...]))
    mask = mask_ref[...]

    # Numerator operand: blockdiag(K^T V) * scale.
    w_ref[:, :hmp] = (kvs * mask * scale).astype(w_ref.dtype)

    # Denominator operand: D[i, j] = scale * ksum_i * [head(i) == head(j)], built as
    # diag(scale*ksum) @ head_mask via an iota identity so no (1,HMp)->(HMp,1)
    # transpose is needed.  One-off tiny matmul.
    rows = lax.broadcasted_iota(jnp.int32, (hmp, hmp), 0)
    cols = lax.broadcasted_iota(jnp.int32, (hmp, hmp), 1)
    eye = (rows == cols).astype(f32)
    d = jnp.dot(eye * (ksum * scale), mask, preferred_element_type=f32)
    w_ref[:, hmp:] = d.astype(w_ref.dtype)


# ------------------------------------------------------------------------------------
# Kernel 2: apply linear attention to one tile of query rows (grid axis is "parallel").
# Projections are fused (recomputed from the raw x tiles) so no Q/V HBM round trip.
# ------------------------------------------------------------------------------------
def _attn_kernel(xq_ref, xs_ref, wq_ref, bq_ref, wv_ref, bv_ref, w_ref, hmean_ref,
                 out_ref, *, n_queries, hmp, approx_reciprocal):
    f32 = jnp.float32
    n = float(n_queries)

    q = jnp.dot(xq_ref[...], wq_ref[...], preferred_element_type=f32) + bq_ref[...]
    v = jnp.dot(xs_ref[...], wv_ref[...], preferred_element_type=f32) + bv_ref[...]

    # Single fused matmul gives both numerator and per-head-broadcast denominator.
    qw = jnp.dot(q.astype(w_ref.dtype), w_ref[...], preferred_element_type=f32)
    num = qw[:, :hmp] + n * v
    denom = qw[:, hmp:] + n

    # Divide on the EUP reciprocal path, then mean over heads as a matmul against the
    # constant stacked-identity matrix -> lane-dense (multiple-of-128) output block.
    ratio = num * pl.reciprocal(denom, approx=approx_reciprocal)
    out_ref[...] = jnp.dot(ratio.astype(hmean_ref.dtype), hmean_ref[...],
                           preferred_element_type=f32)


# ------------------------------------------------------------------------------------
# Wrapper
# ------------------------------------------------------------------------------------
def trans_conv_layer(query_input, source_input, wq, bq, wk, bk, wv, bv, *,
                     num_heads, out_channels, tile_n=512,
                     approx_reciprocal=True, projection_dtype=None):
    """Forward of TransConvLayer (use_weight=True). Weights are (in_channels, H*M)."""
    N, C = query_input.shape
    if source_input.shape != (N, C):
        raise ValueError("full_attention_conv requires matching query/source shapes "
                         "(the module always calls conv(x, x)).")
    H, M = num_heads, out_channels
    f32 = jnp.float32
    compute_dtype = projection_dtype
    mxu_dtype = f32 if compute_dtype is None else compute_dtype

    # --- lane-dense head padding: H * M_pad is a multiple of 128 ----------------------
    lane = 128
    m_unit = lane // math.gcd(H, lane)
    M_pad = _round_up(M, m_unit)
    HMp = H * M_pad
    out_lanes = _round_up(M_pad, lane)

    def pad_proj(w, b):
        w = jnp.pad(w.reshape(C, H, M), ((0, 0), (0, 0), (0, M_pad - M))).reshape(C, HMp)
        b = jnp.pad(b.reshape(1, H, M), ((0, 0), (0, 0), (0, M_pad - M))).reshape(1, HMp)
        return w, b

    wq_p, bq_p = pad_proj(wq, bq)
    wk_p, bk_p = pad_proj(wk, bk)
    wv_p, bv_p = pad_proj(wv, bv)

    # --- row tiling ---------------------------------------------------------------------
    row_align = 8 if compute_dtype is None else 16          # bf16 sublane packing
    tile = min(_round_up(N, row_align), max(_round_up(tile_n, row_align), row_align))
    row_tiles = -(-N // tile)
    num_partials = 2 if row_tiles >= 2 else 1                # v7x: 2nd TC shares kernel 1
    Npad = _round_up(N, num_partials * tile)
    tiles_per_partial = Npad // (num_partials * tile)
    num_tiles_total = Npad // tile

    xq = jnp.pad(query_input, ((0, Npad - N), (0, 0)))
    xs = jnp.pad(source_input, ((0, Npad - N), (0, 0)))

    # Optional bf16 operands for every MXU matmul (v6e/v7x fast path); accumulation and
    # all post-matmul elementwise math stay f32.
    if compute_dtype is not None:
        xq, xs = xq.astype(compute_dtype), xs.astype(compute_dtype)
        wq_p = wq_p.astype(compute_dtype)
        wk_p = wk_p.astype(compute_dtype)
        wv_p = wv_p.astype(compute_dtype)

    # Constant head-structure matrices, built once outside the kernels.
    head_id = jnp.arange(HMp, dtype=jnp.int32) // M_pad
    head_mask = (head_id[:, None] == head_id[None, :]).astype(f32)           # (HMp,HMp)
    chan_id = jnp.arange(HMp, dtype=jnp.int32) % M_pad
    head_mean = ((chan_id[:, None] ==
                  jnp.arange(out_lanes, dtype=jnp.int32)[None, :]).astype(f32)
                 / H).astype(mxu_dtype)                                      # (HMp,out_lanes)

    vmem = functools.partial(pl.BlockSpec, memory_space=pltpu.MemorySpace.VMEM)
    vmem_cap = 48 * 1024 * 1024   # safe on v7x (64 MiB physical) and v5e/v6e (128 MiB)

    # --- kernel 1: row-tiled shared statistics -----------------------------------------
    P = num_partials
    kvs_p, ksum_p, qn_p, kn_p = pl.pallas_call(
        functools.partial(_stats_kernel, n_valid=N, n_rows_total=Npad, tile=tile,
                          tiles_per_partial=tiles_per_partial),
        grid=(P, tiles_per_partial),
        out_shape=(
            jax.ShapeDtypeStruct((P, HMp, HMp), f32),   # partial K^T V
            jax.ShapeDtypeStruct((P, 1, HMp), f32),     # partial sum_l K
            jax.ShapeDtypeStruct((P, 1, 1), f32),       # partial ||Q||_F^2
            jax.ShapeDtypeStruct((P, 1, 1), f32),       # partial ||K||_F^2
        ),
        in_specs=[
            pl.BlockSpec((tile, C), lambda p, r: (p * tiles_per_partial + r, 0)),
            pl.BlockSpec((tile, C), lambda p, r: (p * tiles_per_partial + r, 0)),
            pl.BlockSpec((C, HMp), lambda p, r: (0, 0)),
            pl.BlockSpec((1, HMp), lambda p, r: (0, 0)),
            pl.BlockSpec((C, HMp), lambda p, r: (0, 0)),
            pl.BlockSpec((1, HMp), lambda p, r: (0, 0)),
            pl.BlockSpec((C, HMp), lambda p, r: (0, 0)),
            pl.BlockSpec((1, HMp), lambda p, r: (0, 0)),
        ],
        out_specs=(
            pl.BlockSpec((None, HMp, HMp), lambda p, r: (p, 0, 0)),
            pl.BlockSpec((None, 1, HMp), lambda p, r: (p, 0, 0)),
            pl.BlockSpec((None, 1, 1), lambda p, r: (p, 0, 0)),
            pl.BlockSpec((None, 1, 1), lambda p, r: (p, 0, 0)),
        ),
        compiler_params=pltpu.CompilerParams(
            dimension_semantics=("parallel", "arbitrary"),
            vmem_limit_bytes=vmem_cap),
    )(xq, xs, wq_p, bq_p, wk_p, bk_p, wv_p, bv_p)

    # --- epilogue: combine partials, apply scale/mask, build fused operand W -----------
    w_mat = pl.pallas_call(
        _combine_kernel,
        out_shape=jax.ShapeDtypeStruct((HMp, 2 * HMp), mxu_dtype),
        in_specs=[vmem() for _ in range(5)],
        out_specs=vmem(),
    )(kvs_p, ksum_p, qn_p, kn_p, head_mask)

    # --- kernel 2: per-query-tile attention apply (parallel grid, lane-dense output) ---
    # TODO(synk): shared constant-index operands (weights, W, head_mean) are still
    # double-buffered by the pipeliner; at very large HMp consider pipeline_mode to
    # reclaim that VMEM for bigger row tiles.
    out_padded = pl.pallas_call(
        functools.partial(_attn_kernel, n_queries=N, hmp=HMp,
                          approx_reciprocal=approx_reciprocal),
        grid=(num_tiles_total,),
        out_shape=jax.ShapeDtypeStruct((Npad, out_lanes), f32),
        in_specs=[
            pl.BlockSpec((tile, C), lambda i: (i, 0)),          # xq tile
            pl.BlockSpec((tile, C), lambda i: (i, 0)),          # xs tile
            pl.BlockSpec((C, HMp), lambda i: (0, 0)),           # Wq (shared)
            pl.BlockSpec((1, HMp), lambda i: (0, 0)),           # bq (shared)
            pl.BlockSpec((C, HMp), lambda i: (0, 0)),           # Wv (shared)
            pl.BlockSpec((1, HMp), lambda i: (0, 0)),           # bv (shared)
            pl.BlockSpec((HMp, 2 * HMp), lambda i: (0, 0)),     # fused [kvs | D]
            pl.BlockSpec((HMp, out_lanes), lambda i: (0, 0)),   # head mean (shared)
        ],
        out_specs=pl.BlockSpec((tile, out_lanes), lambda i: (i, 0)),
        compiler_params=pltpu.CompilerParams(
            dimension_semantics=("parallel",),
            vmem_limit_bytes=vmem_cap),
    )(xq, xs, wq_p, bq_p, wv_p, bv_p, w_mat, head_mean)

    return out_padded[:N, :M]


# ------------------------------------------------------------------------------------
# Pure-JAX transcription of the PyTorch forward, for validation.
# ------------------------------------------------------------------------------------
def reference(xq, xs, wq, bq, wk, bk, wv, bv, H, M):
    q = (xq @ wq + bq).reshape(-1, H, M)
    k = (xs @ wk + bk).reshape(-1, H, M)
    v = (xs @ wv + bv).reshape(-1, H, M)
    q = q / jnp.linalg.norm(q)
    k = k / jnp.linalg.norm(k)
    N = q.shape[0]
    kvs = jnp.einsum('lhm,lhd->hmd', k, v)
    num = jnp.einsum('nhm,hmd->nhd', q, kvs) + N * v
    ks_sum = jnp.einsum('lhm->hm', k)
    denom = jnp.einsum('nhm,hm->nh', q, ks_sum)[..., None] + N
    return (num / denom).mean(axis=1)


if __name__ == "__main__":
    N, C_in, H, M = 8, 32, 4, 16

    key = jax.random.PRNGKey(0)
    keys = jax.random.split(key, 12)
    (kq, ksrc, k1, k2, k3, k4, k5, k6, k7, k8, k9, k10) = keys

    query_input = jax.random.normal(kq, (N, C_in), jnp.float32)
    source_input = jax.random.normal(ksrc, (N, C_in), jnp.float32)

    # Linear params (in_channels -> H*M), stored transposed w.r.t. PyTorch: (C_in, H*M).
    wq = jax.random.normal(k1, (C_in, H * M), jnp.float32) * 0.1
    wk = jax.random.normal(k2, (C_in, H * M), jnp.float32) * 0.1
    wv = jax.random.normal(k3, (C_in, H * M), jnp.float32) * 0.1
    bq = jax.random.normal(k4, (1, H * M), jnp.float32) * 0.1
    bk = jax.random.normal(k5, (1, H * M), jnp.float32) * 0.1
    bv = jax.random.normal(k6, (1, H * M), jnp.float32) * 0.1

    ref = jax.block_until_ready(
        reference(query_input, source_input, wq, bq, wk, bk, wv, bv, H, M))

    # 1) Exact-arithmetic path (tight tolerance).
    out = jax.block_until_ready(
        trans_conv_layer(query_input, source_input, wq, bq, wk, bk, wv, bv,
                         num_heads=H, out_channels=M, approx_reciprocal=False))
    assert out.shape == (N, M), out.shape
    np.testing.assert_allclose(np.asarray(out), np.asarray(ref), rtol=1e-3, atol=1e-5)

    # 2) EUP approximate-reciprocal path (default performance path).
    out_fast = jax.block_until_ready(
        trans_conv_layer(query_input, source_input, wq, bq, wk, bk, wv, bv,
                         num_heads=H, out_channels=M, approx_reciprocal=True))
    np.testing.assert_allclose(np.asarray(out_fast), np.asarray(ref),
                               rtol=2e-2, atol=1e-3)

    # 3) bf16 MXU operands (v6e/v7x fast path), f32 accumulation / epilogue.
    out_bf16 = jax.block_until_ready(
        trans_conv_layer(query_input, source_input, wq, bq, wk, bk, wv, bv,
                         num_heads=H, out_channels=M, approx_reciprocal=True,
                         projection_dtype=jnp.bfloat16))
    np.testing.assert_allclose(np.asarray(out_bf16), np.asarray(ref),
                               rtol=1e-1, atol=1e-2)

    # 4) Non-multiple-of-8 row count exercises the row-padding / masking path.
    N2 = 10
    q2 = jax.random.normal(k7, (N2, C_in), jnp.float32)
    s2 = jax.random.normal(k8, (N2, C_in), jnp.float32)
    ref2 = reference(q2, s2, wq, bq, wk, bk, wv, bv, H, M)
    out2 = jax.block_until_ready(
        trans_conv_layer(q2, s2, wq, bq, wk, bk, wv, bv,
                         num_heads=H, out_channels=M, approx_reciprocal=False))
    assert out2.shape == (N2, M), out2.shape
    np.testing.assert_allclose(np.asarray(out2), np.asarray(ref2), rtol=1e-3, atol=1e-5)

    # 5) Multi-tile / two-partial reduction path (small tile_n forces grid=(2, R) in
    #    kernel 1 and a multi-step accumulator), with row padding.
    N3 = 50
    q3 = jax.random.normal(k9, (N3, C_in), jnp.float32)
    s3 = jax.random.normal(k10, (N3, C_in), jnp.float32)
    ref3 = reference(q3, s3, wq, bq, wk, bk, wv, bv, H, M)
    out3 = jax.block_until_ready(
        trans_conv_layer(q3, s3, wq, bq, wk, bk, wv, bv,
                         num_heads=H, out_channels=M, tile_n=16,
                         approx_reciprocal=False))
    assert out3.shape == (N3, M), out3.shape
    np.testing.assert_allclose(np.asarray(out3), np.asarray(ref3), rtol=1e-3, atol=1e-5)

    print("KERNEL_OK")
</pallas_src>

<mosaic_0001>
module attributes {stable_mosaic.version = 11 : i64} {
  func.func @_stats_kernel(%arg0: i32, %arg1: i32, %arg2: memref<8x32xf32, #tpu.memory_space<vmem>>, %arg3: memref<8x32xf32, #tpu.memory_space<vmem>>, %arg4: memref<32x128xf32, #tpu.memory_space<vmem>>, %arg5: memref<1x128xf32, #tpu.memory_space<vmem>>, %arg6: memref<32x128xf32, #tpu.memory_space<vmem>>, %arg7: memref<1x128xf32, #tpu.memory_space<vmem>>, %arg8: memref<32x128xf32, #tpu.memory_space<vmem>>, %arg9: memref<1x128xf32, #tpu.memory_space<vmem>>, %arg10: memref<1x128x128xf32, #tpu.memory_space<vmem>>, %arg11: memref<1x1x128xf32, #tpu.memory_space<vmem>>, %arg12: memref<1x1x1xf32, #tpu.memory_space<vmem>>, %arg13: memref<1x1x1xf32, #tpu.memory_space<vmem>>) attributes {dimension_semantics = [#tpu.dimension_semantics<parallel>, #tpu.dimension_semantics<arbitrary>], iteration_bounds = array<i64: 1, 1>, scalar_prefetch = 0 : i64, scratch_operands = 0 : i64, tpu.core_type = #tpu.core_type<tc>, window_params = [{transform_indices = @transform_0, window_bounds = array<i64: 8, 32>}, {transform_indices = @transform_1, window_bounds = array<i64: 8, 32>}, {pipeline_mode = #tpu.pipeline_mode<synchronous>, transform_indices = @transform_2, window_bounds = array<i64: 32, 128>}, {pipeline_mode = #tpu.pipeline_mode<synchronous>, transform_indices = @transform_3, window_bounds = array<i64: 1, 128>}, {pipeline_mode = #tpu.pipeline_mode<synchronous>, transform_indices = @transform_4, window_bounds = array<i64: 32, 128>}, {pipeline_mode = #tpu.pipeline_mode<synchronous>, transform_indices = @transform_5, window_bounds = array<i64: 1, 128>}, {pipeline_mode = #tpu.pipeline_mode<synchronous>, transform_indices = @transform_6, window_bounds = array<i64: 32, 128>}, {pipeline_mode = #tpu.pipeline_mode<synchronous>, transform_indices = @transform_7, window_bounds = array<i64: 1, 128>}, {transform_indices = @transform_8, window_bounds = array<i64: 1, 128, 128>}, {transform_indices = @transform_9, window_bounds = array<i64: 1, 1, 128>}, {transform_indices = @transform_10, window_bounds = array<i64: 1, 1, 1>}, {transform_indices = @transform_11, window_bounds = array<i64: 1, 1, 1>}]} {
    %c0_i32 = arith.constant 0 : i32
    %0 = arith.cmpi eq, %arg1, %c0_i32 : i32
    %1 = arith.extui %0 : i1 to i32
    %c0_i32_0 = arith.constant 0 : i32
    %2 = arith.cmpi ne, %1, %c0_i32_0 : i32
    scf.if %2 {
      %cst_48 = arith.constant 0.000000e+00 : f32
      %60 = vector.broadcast %cst_48 : f32 to vector<128x128xf32>
      %c0_49 = arith.constant 0 : index
      %c0_50 = arith.constant 0 : index
      %c0_51 = arith.constant 0 : index
      %61 = vector.load %arg10[%c0_49, %c0_50, %c0_51] : memref<1x128x128xf32, #tpu.memory_space<vmem>>, vector<1x128x128xf32>
      %62 = vector.shape_cast %61 : vector<1x128x128xf32> to vector<128x128xf32>
      %63 = vector.shape_cast %60 : vector<128x128xf32> to vector<1x128x128xf32>
      tpu.vector_store %arg10[%c0_49, %c0_50, %c0_51], %63 {strides = array<i32>} : memref<1x128x128xf32, #tpu.memory_space<vmem>>, vector<1x128x128xf32>,
      %cst_52 = arith.constant 0.000000e+00 : f32
      %64 = vector.broadcast %cst_52 : f32 to vector<1x128xf32>
      %c0_53 = arith.constant 0 : index
      %c0_54 = arith.constant 0 : index
      %c0_55 = arith.constant 0 : index
      %65 = vector.load %arg11[%c0_53, %c0_54, %c0_55] : memref<1x1x128xf32, #tpu.memory_space<vmem>>, vector<1x1x128xf32>
      %66 = vector.shape_cast %65 : vector<1x1x128xf32> to vector<1x128xf32>
      %67 = vector.shape_cast %64 : vector<1x128xf32> to vector<1x1x128xf32>
      tpu.vector_store %arg11[%c0_53, %c0_54, %c0_55], %67 {strides = array<i32>} : memref<1x1x128xf32, #tpu.memory_space<vmem>>, vector<1x1x128xf32>,
      %cst_56 = arith.constant 0.000000e+00 : f32
      %68 = vector.broadcast %cst_56 : f32 to vector<1x1xf32>
      %c0_57 = arith.constant 0 : index
      %c0_58 = arith.constant 0 : index
      %c0_59 = arith.constant 0 : index
      %69 = vector.load %arg12[%c0_57, %c0_58, %c0_59] : memref<1x1x1xf32, #tpu.memory_space<vmem>>, vector<1x1x1xf32>
      %70 = vector.shape_cast %69 : vector<1x1x1xf32> to vector<1x1xf32>
      %71 = vector.shape_cast %68 : vector<1x1xf32> to vector<1x1x1xf32>
      tpu.vector_store %arg12[%c0_57, %c0_58, %c0_59], %71 {strides = array<i32>} : memref<1x1x1xf32, #tpu.memory_space<vmem>>, vector<1x1x1xf32>,
      %cst_60 = arith.constant 0.000000e+00 : f32
      %72 = vector.broadcast %cst_60 : f32 to vector<1x1xf32>
      %c0_61 = arith.constant 0 : index
      %c0_62 = arith.constant 0 : index
      %c0_63 = arith.constant 0 : index
      %73 = vector.load %arg13[%c0_61, %c0_62, %c0_63] : memref<1x1x1xf32, #tpu.memory_space<vmem>>, vector<1x1x1xf32>
      %74 = vector.shape_cast %73 : vector<1x1x1xf32> to vector<1x1xf32>
      %75 = vector.shape_cast %72 : vector<1x1xf32> to vector<1x1x1xf32>
      tpu.vector_store %arg13[%c0_61, %c0_62, %c0_63], %75 {strides = array<i32>} : memref<1x1x1xf32, #tpu.memory_space<vmem>>, vector<1x1x1xf32>,
    } else {
    }
    %c0 = arith.constant 0 : index
    %c0_1 = arith.constant 0 : index
    %3 = vector.load %arg2[%c0, %c0_1] : memref<8x32xf32, #tpu.memory_space<vmem>>, vector<8x32xf32>
    %c0_2 = arith.constant 0 : index
    %c0_3 = arith.constant 0 : index
    %4 = vector.load %arg4[%c0_2, %c0_3] : memref<32x128xf32, #tpu.memory_space<vmem>>, vector<32x128xf32>
    %cst = arith.constant dense<0.000000e+00> : vector<8x128xf32>
    %5 = tpu.matmul %3, %4, %cst {dimension_numbers = #tpu.dot_dimension_numbers<[1], [0], [0], [1], [0, 0, 1, 1], [], []>} : vector<8x32xf32>, vector<32x128xf32>, vector<8x128xf32> -> vector<8x128xf32>
    %c0_4 = arith.constant 0 : index
    %c0_5 = arith.constant 0 : index
    %6 = vector.load %arg5[%c0_4, %c0_5] : memref<1x128xf32, #tpu.memory_space<vmem>>, vector<1x128xf32>
    %7 = vector.broadcast %6 : vector<1x128xf32> to vector<8x128xf32>
    %8 = arith.addf %5, %7 : vector<8x128xf32>
    %c0_6 = arith.constant 0 : index
    %c0_7 = arith.constant 0 : index
    %9 = vector.load %arg3[%c0_6, %c0_7] : memref<8x32xf32, #tpu.memory_space<vmem>>, vector<8x32xf32>
    %c0_8 = arith.constant 0 : index
    %c0_9 = arith.constant 0 : index
    %10 = vector.load %arg6[%c0_8, %c0_9] : memref<32x128xf32, #tpu.memory_space<vmem>>, vector<32x128xf32>
    %cst_10 = arith.constant dense<0.000000e+00> : vector<8x128xf32>
    %11 = tpu.matmul %9, %10, %cst_10 {dimension_numbers = #tpu.dot_dimension_numbers<[1], [0], [0], [1], [0, 0, 1, 1], [], []>} : vector<8x32xf32>, vector<32x128xf32>, vector<8x128xf32> -> vector<8x128xf32>
    %c0_11 = arith.constant 0 : index
    %c0_12 = arith.constant 0 : index
    %12 = vector.load %arg7[%c0_11, %c0_12] : memref<1x128xf32, #tpu.memory_space<vmem>>, vector<1x128xf32>
    %13 = vector.broadcast %12 : vector<1x128xf32> to vector<8x128xf32>
    %14 = arith.addf %11, %13 : vector<8x128xf32>
    %c0_13 = arith.constant 0 : index
    %c0_14 = arith.constant 0 : index
    %15 = vector.load %arg3[%c0_13, %c0_14] : memref<8x32xf32, #tpu.memory_space<vmem>>, vector<8x32xf32>
    %c0_15 = arith.constant 0 : index
    %c0_16 = arith.constant 0 : index
    %16 = vector.load %arg8[%c0_15, %c0_16] : memref<32x128xf32, #tpu.memory_space<vmem>>, vector<32x128xf32>
    %cst_17 = arith.constant dense<0.000000e+00> : vector<8x128xf32>
    %17 = tpu.matmul %15, %16, %cst_17 {dimension_numbers = #tpu.dot_dimension_numbers<[1], [0], [0], [1], [0, 0, 1, 1], [], []>} : vector<8x32xf32>, vector<32x128xf32>, vector<8x128xf32> -> vector<8x128xf32>
    %c0_18 = arith.constant 0 : index
    %c0_19 = arith.constant 0 : index
    %18 = vector.load %arg9[%c0_18, %c0_19] : memref<1x128xf32, #tpu.memory_space<vmem>>, vector<1x128xf32>
    %19 = vector.broadcast %18 : vector<1x128xf32> to vector<8x128xf32>
    %20 = arith.addf %17, %19 : vector<8x128xf32>
    %c0_20 = arith.constant 0 : index
    %c0_21 = arith.constant 0 : index
    %c0_22 = arith.constant 0 : index
    %21 = vector.load %arg12[%c0_20, %c0_21, %c0_22] : memref<1x1x1xf32, #tpu.memory_space<vmem>>, vector<1x1x1xf32>
    %22 = vector.shape_cast %21 : vector<1x1x1xf32> to vector<1x1xf32>
    %23 = arith.mulf %8, %8 : vector<8x128xf32>
    %24 = vector.shape_cast %23 : vector<8x128xf32> to vector<1x8x128xf32>
    %cst_23 = arith.constant dense<0.000000e+00> : vector<1xf32>
    %25 = vector.multi_reduction <add>, %24, %cst_23 [1, 2] : vector<1x8x128xf32> to vector<1xf32>
    %26 = vector.shape_cast %25 : vector<1xf32> to vector<1x1x1xf32>
    %27 = vector.extract %26[0, 0, 0] : f32 from vector<1x1x1xf32>
    %28 = vector.broadcast %27 : f32 to vector<1x1xf32>
    %29 = arith.addf %22, %28 : vector<1x1xf32>
    %c0_24 = arith.constant 0 : index
    %c0_25 = arith.constant 0 : index
    %c0_26 = arith.constant 0 : index
    %30 = vector.load %arg12[%c0_24, %c0_25, %c0_26] : memref<1x1x1xf32, #tpu.memory_space<vmem>>, vector<1x1x1xf32>
    %31 = vector.shape_cast %30 : vector<1x1x1xf32> to vector<1x1xf32>
    %32 = vector.shape_cast %29 : vector<1x1xf32> to vector<1x1x1xf32>
    tpu.vector_store %arg12[%c0_24, %c0_25, %c0_26], %32 {strides = array<i32>} : memref<1x1x1xf32, #tpu.memory_space<vmem>>, vector<1x1x1xf32>,
    %c0_27 = arith.constant 0 : index
    %c0_28 = arith.constant 0 : index
    %c0_29 = arith.constant 0 : index
    %33 = vector.load %arg13[%c0_27, %c0_28, %c0_29] : memref<1x1x1xf32, #tpu.memory_space<vmem>>, vector<1x1x1xf32>
    %34 = vector.shape_cast %33 : vector<1x1x1xf32> to vector<1x1xf32>
    %35 = arith.mulf %14, %14 : vector<8x128xf32>
    %36 = vector.shape_cast %35 : vector<8x128xf32> to vector<1x8x128xf32>
    %cst_30 = arith.constant dense<0.000000e+00> : vector<1xf32>
    %37 = vector.multi_reduction <add>, %36, %cst_30 [1, 2] : vector<1x8x128xf32> to vector<1xf32>
    %38 = vector.shape_cast %37 : vector<1xf32> to vector<1x1x1xf32>
    %39 = vector.extract %38[0, 0, 0] : f32 from vector<1x1x1xf32>
    %40 = vector.broadcast %39 : f32 to vector<1x1xf32>
    %41 = arith.addf %34, %40 : vector<1x1xf32>
    %c0_31 = arith.constant 0 : index
    %c0_32 = arith.constant 0 : index
    %c0_33 = arith.constant 0 : index
    %42 = vector.load %arg13[%c0_31, %c0_32, %c0_33] : memref<1x1x1xf32, #tpu.memory_space<vmem>>, vector<1x1x1xf32>
    %43 = vector.shape_cast %42 : vector<1x1x1xf32> to vector<1x1xf32>
    %44 = vector.shape_cast %41 : vector<1x1xf32> to vector<1x1x1xf32>
    tpu.vector_store %arg13[%c0_31, %c0_32, %c0_33], %44 {strides = array<i32>} : memref<1x1x1xf32, #tpu.memory_space<vmem>>, vector<1x1x1xf32>,
    %c0_34 = arith.constant 0 : index
    %c0_35 = arith.constant 0 : index
    %c0_36 = arith.constant 0 : index
    %45 = vector.load %arg11[%c0_34, %c0_35, %c0_36] : memref<1x1x128xf32, #tpu.memory_space<vmem>>, vector<1x1x128xf32>
    %46 = vector.shape_cast %45 : vector<1x1x128xf32> to vector<1x128xf32>
    %cst_37 = arith.constant dense<0.000000e+00> : vector<128xf32>
    %47 = vector.multi_reduction <add>, %14, %cst_37 [0] : vector<8x128xf32> to vector<128xf32>
    %48 = vector.shape_cast %47 : vector<128xf32> to vector<1x128xf32>
    %49 = arith.addf %46, %48 : vector<1x128xf32>
    %c0_38 = arith.constant 0 : index
    %c0_39 = arith.constant 0 : index
    %c0_40 = arith.constant 0 : index
    %50 = vector.load %arg11[%c0_38, %c0_39, %c0_40] : memref<1x1x128xf32, #tpu.memory_space<vmem>>, vector<1x1x128xf32>
    %51 = vector.shape_cast %50 : vector<1x1x128xf32> to vector<1x128xf32>
    %52 = vector.shape_cast %49 : vector<1x128xf32> to vector<1x1x128xf32>
    tpu.vector_store %arg11[%c0_38, %c0_39, %c0_40], %52 {strides = array<i32>} : memref<1x1x128xf32, #tpu.memory_space<vmem>>, vector<1x1x128xf32>,
    %c0_41 = arith.constant 0 : index
    %c0_42 = arith.constant 0 : index
    %c0_43 = arith.constant 0 : index
    %53 = vector.load %arg10[%c0_41, %c0_42, %c0_43] : memref<1x128x128xf32, #tpu.memory_space<vmem>>, vector<1x128x128xf32>
    %54 = vector.shape_cast %53 : vector<1x128x128xf32> to vector<128x128xf32>
    %cst_44 = arith.constant dense<0.000000e+00> : vector<128x128xf32>
    %55 = tpu.matmul %14, %20, %cst_44 {dimension_numbers = #tpu.dot_dimension_numbers<[0], [0], [1], [1], [0, 1, 1, 1], [], []>} : vector<8x128xf32>, vector<8x128xf32>, vector<128x128xf32> -> vector<128x128xf32>
    %56 = arith.addf %54, %55 : vector<128x128xf32>
    %c0_45 = arith.constant 0 : index
    %c0_46 = arith.constant 0 : index
    %c0_47 = arith.constant 0 : index
    %57 = vector.load %arg10[%c0_45, %c0_46, %c0_47] : memref<1x128x128xf32, #tpu.memory_space<vmem>>, vector<1x128x128xf32>
    %58 = vector.shape_cast %57 : vector<1x128x128xf32> to vector<128x128xf32>
    %59 = vector.shape_cast %56 : vector<128x128xf32> to vector<1x128x128xf32>
    tpu.vector_store %arg10[%c0_45, %c0_46, %c0_47], %59 {strides = array<i32>} : memref<1x128x128xf32, #tpu.memory_space<vmem>>, vector<1x128x128xf32>,
    return
  }
  func.func @transform_0(%arg0: i32, %arg1: i32) -> (i32, i32) {
    %c1_i32 = arith.constant 1 : i32
    %0 = arith.muli %arg0, %c1_i32 : i32
    %1 = arith.addi %0, %arg1 : i32
    %c0_i32 = arith.constant 0 : i32
    %c0_i32_0 = arith.constant 0 : i32
    return %1, %c0_i32 : i32, i32
  }
  func.func @transform_1(%arg0: i32, %arg1: i32) -> (i32, i32) {
    %c1_i32 = arith.constant 1 : i32
    %0 = arith.muli %arg0, %c1_i32 : i32
    %1 = arith.addi %0, %arg1 : i32
    %c0_i32 = arith.constant 0 : i32
    %c0_i32_0 = arith.constant 0 : i32
    return %1, %c0_i32 : i32, i32
  }
  func.func @transform_2(%arg0: i32, %arg1: i32) -> (i32, i32) {
    %c0_i32 = arith.constant 0 : i32
    %c0_i32_0 = arith.constant 0 : i32
    %c0_i32_1 = arith.constant 0 : i32
    return %c0_i32, %c0_i32_0 : i32, i32
  }
  func.func @transform_3(%arg0: i32, %arg1: i32) -> (i32, i32) {
    %c0_i32 = arith.constant 0 : i32
    %c0_i32_0 = arith.constant 0 : i32
    %c0_i32_1 = arith.constant 0 : i32
    return %c0_i32, %c0_i32_0 : i32, i32
  }
  func.func @transform_4(%arg0: i32, %arg1: i32) -> (i32, i32) {
    %c0_i32 = arith.constant 0 : i32
    %c0_i32_0 = arith.constant 0 : i32
    %c0_i32_1 = arith.constant 0 : i32
    return %c0_i32, %c0_i32_0 : i32, i32
  }
  func.func @transform_5(%arg0: i32, %arg1: i32) -> (i32, i32) {
    %c0_i32 = arith.constant 0 : i32
    %c0_i32_0 = arith.constant 0 : i32
    %c0_i32_1 = arith.constant 0 : i32
    return %c0_i32, %c0_i32_0 : i32, i32
  }
  func.func @transform_6(%arg0: i32, %arg1: i32) -> (i32, i32) {
    %c0_i32 = arith.constant 0 : i32
    %c0_i32_0 = arith.constant 0 : i32
    %c0_i32_1 = arith.constant 0 : i32
    return %c0_i32, %c0_i32_0 : i32, i32
  }
  func.func @transform_7(%arg0: i32, %arg1: i32) -> (i32, i32) {
    %c0_i32 = arith.constant 0 : i32
    %c0_i32_0 = arith.constant 0 : i32
    %c0_i32_1 = arith.constant 0 : i32
    return %c0_i32, %c0_i32_0 : i32, i32
  }
  func.func @transform_8(%arg0: i32, %arg1: i32) -> (i32, i32, i32) {
    %c0_i32 = arith.constant 0 : i32
    %c0_i32_0 = arith.constant 0 : i32
    %c0_i32_1 = arith.constant 0 : i32
    return %arg0, %c0_i32, %c0_i32_0 : i32, i32, i32
  }
  func.func @transform_9(%arg0: i32, %arg1: i32) -> (i32, i32, i32) {
    %c0_i32 = arith.constant 0 : i32
    %c0_i32_0 = arith.constant 0 : i32
    %c0_i32_1 = arith.constant 0 : i32
    return %arg0, %c0_i32, %c0_i32_0 : i32, i32, i32
  }
  func.func @transform_10(%arg0: i32, %arg1: i32) -> (i32, i32, i32) {
    %c0_i32 = arith.constant 0 : i32
    %c0_i32_0 = arith.constant 0 : i32
    %c0_i32_1 = arith.constant 0 : i32
    return %arg0, %c0_i32, %c0_i32_0 : i32, i32, i32
  }
  func.func @transform_11(%arg0: i32, %arg1: i32) -> (i32, i32, i32) {
    %c0_i32 = arith.constant 0 : i32
    %c0_i32_0 = arith.constant 0 : i32
    %c0_i32_1 = arith.constant 0 : i32
    return %arg0, %c0_i32, %c0_i32_0 : i32, i32, i32
  }
}

</mosaic_0001>

<llo_original>
// kernel: tpu_custom_call.1
$region0: #{tpu_custom_call.1}
  #allocation0 [shape = 'u32[]', space=smem, size = 0x4, offset = 0x4, fixed_abs, tag = 'smem constant byte address 0x4 - core index']
  #allocation1 [shape = 'u32[144,128]{1,0:T(1,128)}', space=vmem, size = 0x12000, scoped, tag = 'internal scratch']
  %s0 = inlined_call_operand.hbm [shape: f32[8,32], index: 0, kind: input, shape index: {}]
  %s1 = inlined_call_operand.hbm [shape: f32[8,32], index: 1, kind: input, shape index: {}]
  %s2 = inlined_call_operand.hbm [shape: f32[32,128], index: 2, kind: input, shape index: {}]
  %s3 = inlined_call_operand.vmem [shape: f32[1,128], index: 3, kind: input, shape index: {}]
  %s4 = inlined_call_operand.hbm [shape: f32[32,128], index: 4, kind: input, shape index: {}]
  %s5 = inlined_call_operand.vmem [shape: f32[1,128], index: 5, kind: input, shape index: {}]
  %s6 = inlined_call_operand.hbm [shape: f32[32,128], index: 6, kind: input, shape index: {}]
  %s7 = inlined_call_operand.vmem [shape: f32[1,128], index: 7, kind: input, shape index: {}]
  %s8 = inlined_call_operand.hbm [shape: f32[1,128,128], index: 8, kind: output, shape index: {0}]
  %s9 = inlined_call_operand.hbm [shape: f32[1,1,128], index: 9, kind: output, shape index: {1}]
  %s10 = inlined_call_operand.hbm [shape: f32[1,1,1], index: 10, kind: output, shape index: {2}]
  %s11 = inlined_call_operand.hbm [shape: f32[1,1,1], index: 11, kind: output, shape index: {3}]
  %12 = xla_tuple %s8, %s9, %s10, %s11
  %s13 = sld [smem:[#allocation0]]
  $region90: #{tpu_custom_call.1} parent=0
    _
  %s15 = ssub.s32 1, %s13
  %s16 = scalar_select 0, %s15, %s13
  $region1: #{tpu_custom_call.1} parent=0
    #allocation2 [shape = 'u8[4096]{0}', space=vmem, size = 0x1000, scoped, tag = 'input window, operand 0, single buffered']
    #allocation3 [shape = 's32[1]{0}', space=sflag, size = 0x4, scoped, tag = 'scoped memory for tpu_custom_call.1']
    #allocation4 [shape = 's32[1]{0}', space=sflag, size = 0x4, scoped, tag = 'scoped memory for tpu_custom_call.1']
    #allocation5 [shape = 'u8[4096]{0}', space=vmem, size = 0x1000, scoped, tag = 'input window, operand 1, single buffered']
    #allocation6 [shape = 's32[1]{0}', space=sflag, size = 0x4, scoped, tag = 'scoped memory for tpu_custom_call.1']
    #allocation7 [shape = 'u8[16384]{0}', space=vmem, size = 0x4000, scoped, tag = 'input window, operand 2, single buffered']
    #allocation8 [shape = 'u8[16384]{0}', space=vmem, size = 0x4000, scoped, tag = 'input window, operand 4, single buffered']
    #allocation9 [shape = 's32[1]{0}', space=sflag, size = 0x4, scoped, tag = 'scoped memory for tpu_custom_call.1']
    #allocation10 [shape = 'u8[16384]{0}', space=vmem, size = 0x4000, scoped, tag = 'input window, operand 6, single buffered']
    #allocation11 [shape = 'u8[65536]{0}', space=vmem, size = 0x10000, scoped, tag = 'output window, operand 0, single buffered']
    #allocation12 [shape = 'u8[512]{0}', space=vmem, size = 0x400, scoped, tag = 'output window, operand 1, single buffered']
    #allocation13 [shape = 's32[1]{0}', space=sflag, size = 0x4, scoped, tag = 'scoped memory for tpu_custom_call.1']
    #allocation14 [shape = 'u8[512]{0}', space=vmem, size = 0x400, scoped, tag = 'output window, operand 2, single buffered']
    #allocation15 [shape = 'u8[512]{0}', space=vmem, size = 0x400, scoped, tag = 'output window, operand 3, single buffered']
    #allocation16 [shape = 's32[1]{0}', space=sflag, size = 0x4, scoped, tag = 'scoped memory for tpu_custom_call.1']
    %17 = vsyncpa [#allocation3], 0
    %18 = vsyncpa [#allocation6], 0
    %19 = vsyncpa [#allocation9], 0
    %20 = vsyncpa [#allocation4], 0
    %21 = vsyncpa [#allocation13], 0
    %22 = vsyncpa [#allocation16], 0
    // Predicated region
    $region2: #{tpu_custom_call.1} parent=1 // pred_check
      _
    $region3: #{tpu_custom_call.1} parent=1 // pred_check_branch
      %24 = sbr.rel (0) target = $region5
    $region4: #{tpu_custom_call.1} parent=1 // pred_region
      %s25 = sadd.s32 0, 0
      %s27 = ssub.s32 128, 128
      %28 = vsyncadd [#allocation3], %s27
      %s29 = smul.addr %s25, 128
      %s30 = scalar_lea.hbm %s0, %s29
      %s32 = sshll.u32 [#allocation2], 4
      %s33 = int_to_ptr.vmem [resolvable:$true] %s32
      %35 = dma.hbm_to_vmem [thread:$0]  %s30, 128, %s33, [#allocation3]
    $region5: #{tpu_custom_call.1} parent=1 // pred_fallthru
      _
    // Predicated region
    $region6: #{tpu_custom_call.1} parent=1 // pred_check
      _
    $region7: #{tpu_custom_call.1} parent=1 // pred_check_branch
      %37 = sbr.rel (0) target = $region9
    $region8: #{tpu_custom_call.1} parent=1 // pred_region
      %s38 = sadd.s32 0, 0
      %s40 = ssub.s32 128, 128
      %41 = vsyncadd [#allocation6], %s40
      %s42 = smul.addr %s38, 128
      %s43 = scalar_lea.hbm %s1, %s42
      %s45 = sshll.u32 [#allocation5], 4
      %s46 = int_to_ptr.vmem [resolvable:$true] %s45
      %48 = dma.hbm_to_vmem [thread:$0]  %s43, 128, %s46, [#allocation6]
    $region9: #{tpu_custom_call.1} parent=1 // pred_fallthru
      _
    // Predicated region
    $region10: #{tpu_custom_call.1} parent=1 // pred_check
      _
    $region11: #{tpu_custom_call.1} parent=1 // pred_check_branch
      %50 = sbr.rel (0) target = $region13
    $region12: #{tpu_custom_call.1} parent=1 // pred_region
      %s52 = ssub.s32 512, 512
      %53 = vsyncadd [#allocation6], %s52
      %s54 = sshll.u32 [#allocation7], 4
      %s55 = int_to_ptr.vmem [resolvable:$true] %s54
      %60 = dma.hbm_to_vmem [thread:$0]  %s2, 512, %s55, [#allocation6], 128, 128, 8
    $region13: #{tpu_custom_call.1} parent=1 // pred_fallthru
      _
    // Predicated region
    $region14: #{tpu_custom_call.1} parent=1 // pred_check
      _
    $region15: #{tpu_custom_call.1} parent=1 // pred_check_branch
      %62 = sbr.rel (0) target = $region17
    $region16: #{tpu_custom_call.1} parent=1 // pred_region
      _
    $region17: #{tpu_custom_call.1} parent=1 // pred_fallthru
      _
    // Predicated region
    $region18: #{tpu_custom_call.1} parent=1 // pred_check
      _
    $region19: #{tpu_custom_call.1} parent=1 // pred_check_branch
      %64 = sbr.rel (0) target = $region21
    $region20: #{tpu_custom_call.1} parent=1 // pred_region
      %s66 = ssub.s32 512, 512
      %67 = vsyncadd [#allocation9], %s66
      %s68 = sshll.u32 [#allocation8], 4
      %s69 = int_to_ptr.vmem [resolvable:$true] %s68
      %74 = dma.hbm_to_vmem [thread:$0]  %s4, 512, %s69, [#allocation9], 128, 128, 8
    $region21: #{tpu_custom_call.1} parent=1 // pred_fallthru
      _
    // Predicated region
    $region22: #{tpu_custom_call.1} parent=1 // pred_check
      _
    $region23: #{tpu_custom_call.1} parent=1 // pred_check_branch
      %76 = sbr.rel (0) target = $region25
    $region24: #{tpu_custom_call.1} parent=1 // pred_region
      _
    $region25: #{tpu_custom_call.1} parent=1 // pred_fallthru
      _
    // Predicated region
    $region26: #{tpu_custom_call.1} parent=1 // pred_check
      _
    $region27: #{tpu_custom_call.1} parent=1 // pred_check_branch
      %78 = sbr.rel (0) target = $region29
    $region28: #{tpu_custom_call.1} parent=1 // pred_region
      %s80 = ssub.s32 512, 512
      %81 = vsyncadd [#allocation9], %s80
      %s82 = sshll.u32 [#allocation10], 4
      %s83 = int_to_ptr.vmem [resolvable:$true] %s82
      %88 = dma.hbm_to_vmem [thread:$0]  %s6, 512, %s83, [#allocation9], 128, 128, 8
    $region29: #{tpu_custom_call.1} parent=1 // pred_fallthru
      _
    // Predicated region
    $region30: #{tpu_custom_call.1} parent=1 // pred_check
      _
    $region31: #{tpu_custom_call.1} parent=1 // pred_check_branch
      %90 = sbr.rel (0) target = $region33
    $region32: #{tpu_custom_call.1} parent=1 // pred_region
      _
    $region33: #{tpu_custom_call.1} parent=1 // pred_fallthru
      _
    // Predicated region
    $region34: #{tpu_custom_call.1} parent=1 // pred_check
      _
    $region35: #{tpu_custom_call.1} parent=1 // pred_check_branch
      %92 = sbr.rel (0) target = $region37
    $region36: #{tpu_custom_call.1} parent=1 // pred_region
      %93 = dma.done [#allocation3], 128
    $region37: #{tpu_custom_call.1} parent=1 // pred_fallthru
      _
    // Predicated region
    $region38: #{tpu_custom_call.1} parent=1 // pred_check
      _
    $region39: #{tpu_custom_call.1} parent=1 // pred_check_branch
      %95 = sbr.rel (0) target = $region41
    $region40: #{tpu_custom_call.1} parent=1 // pred_region
      %96 = dma.done [#allocation6], 128
    $region41: #{tpu_custom_call.1} parent=1 // pred_fallthru
      _
    // Predicated region
    $region42: #{tpu_custom_call.1} parent=1 // pred_check
      _
    $region43: #{tpu_custom_call.1} parent=1 // pred_check_branch
      %98 = sbr.rel (0) target = $region45
    $region44: #{tpu_custom_call.1} parent=1 // pred_region
      %99 = dma.done [#allocation6], 512
    $region45: #{tpu_custom_call.1} parent=1 // pred_fallthru
      _
    // Predicated region
    $region46: #{tpu_custom_call.1} parent=1 // pred_check
      _
    $region47: #{tpu_custom_call.1} parent=1 // pred_check_branch
      %101 = sbr.rel (0) target = $region49
    $region48: #{tpu_custom_call.1} parent=1 // pred_region
      %102 = dma.done [#allocation9], 512
    $region49: #{tpu_custom_call.1} parent=1 // pred_fallthru
      _
    // Predicated region
    $region50: #{tpu_custom_call.1} parent=1 // pred_check
      _
    $region51: #{tpu_custom_call.1} parent=1 // pred_check_branch
      %104 = sbr.rel (0) target = $region53
    $region52: #{tpu_custom_call.1} parent=1 // pred_region
      %105 = dma.done [#allocation9], 512
    $region53: #{tpu_custom_call.1} parent=1 // pred_fallthru
      _
    %s106 = sadd.s32 0, 0
    %s107 = sadd.s32 0, 0
    %p108 = scmp.eq.s32.totalorder 0, 0
    // Predicated region
    $region54: #{tpu_custom_call.1} parent=1 // pred_check
      %p109 = pneg %p108
    $region55: #{tpu_custom_call.1} parent=1 // pred_check_branch
      %111 = sbr.rel (%p109) target = $region57
    $region56: #{tpu_custom_call.1} parent=1 // pred_region
      %112 = vst [vmem:[#allocation11] sm:$0xff] 0.0
      %113 = vst [vmem:[#allocation11 + $0x8] sm:$0xff] 0.0
      %114 = vst [vmem:[#allocation11 + $0x10] sm:$0xff] 0.0
      %115 = vst [vmem:[#allocation11 + $0x18] sm:$0xff] 0.0
      %116 = vst [vmem:[#allocation11 + $0x20] sm:$0xff] 0.0
      %117 = vst [vmem:[#allocation11 + $0x28] sm:$0xff] 0.0
      %118 = vst [vmem:[#allocation11 + $0x30] sm:$0xff] 0.0
      %119 = vst [vmem:[#allocation11 + $0x38] sm:$0xff] 0.0
      %120 = vst [vmem:[#allocation11 + $0x40] sm:$0xff] 0.0
      %121 = vst [vmem:[#allocation11 + $0x48] sm:$0xff] 0.0
      %122 = vst [vmem:[#allocation11 + $0x50] sm:$0xff] 0.0
      %123 = vst [vmem:[#allocation11 + $0x58] sm:$0xff] 0.0
      %124 = vst [vmem:[#allocation11 + $0x60] sm:$0xff] 0.0
      %125 = vst [vmem:[#allocation11 + $0x68] sm:$0xff] 0.0
      %126 = vst [vmem:[#allocation11 + $0x70] sm:$0xff] 0.0
      %127 = vst [vmem:[#allocation11 + $0x78] sm:$0xff] 0.0
      %128 = vst [vmem:[#allocation12] sm:$0x1] 0.0
      %vm129 = vcmask 0
      %130 = vst.msk [vmem:[#allocation14] sm:$0x1] %vm129, 0.0
      %131 = vst.msk [vmem:[#allocation15] sm:$0x1] %vm129, 0.0
    $region57: #{tpu_custom_call.1} parent=1 // pred_fallthru
      _
    %v132 = vld [vmem:[#allocation2] sm:$0xff]
    %v133 = vld [vmem:[#allocation7] sm:$0xff]
    %v134 = vld [vmem:[#allocation7 + $0x8] sm:$0xff]
    %v135 = vld [vmem:[#allocation7 + $0x10] sm:$0xff]
    %v136 = vld [vmem:[#allocation7 + $0x18] sm:$0xff]
    %v137 = vld [vmem:[%s3] sm:$0x1]
    %v139 = vlaneseq
    %v140 = vshrl.u32 %v139, 7
    %v141 = vsub.s32 0, %v140
    %v142 = vrot.slane %v137, %v141
    %vm144 = vcmask 261120
    %v146 = vsel %vm144, %v132, 0
    %148 = vmatprep.subr.mxu0 0.0
    %149 = vmatpush1.msra.mxu0 0.0
    %150 = vmatprep.subr.mxu0 0.0
    %151 = vmatpush1.msra.mxu0 0.0
    %152 = vmatprep.subr.mxu0 0.0
    %153 = vmatpush1.msra.mxu0 0.0
    %154 = vmatprep.subr.mxu0 0.0
    %155 = vmatpush1.msra.mxu0 0.0
    %156 = vmatprep.subr.mxu0 0.0
    %157 = vmatpush1.msra.mxu0 0.0
    %158 = vmatprep.subr.mxu0 0.0
    %159 = vmatpush1.msra.mxu0 0.0
    %160 = vmatprep.subr.mxu0 0.0
    %161 = vmatpush1.msra.mxu0 0.0
    %162 = vmatprep.subr.mxu0 0.0
    %163 = vmatpush1.msra.mxu0 0.0
    %164 = vmatprep.subr.mxu0 0.0
    %165 = vmatpush1.msra.mxu0 0.0
    %166 = vmatprep.subr.mxu0 0.0
    %167 = vmatpush1.msra.mxu0 0.0
    %168 = vmatprep.subr.mxu0 0.0
    %169 = vmatpush1.msra.mxu0 0.0
    %170 = vmatprep.subr.mxu0 0.0
    %171 = vmatpush1.msra.mxu0 0.0
    %172 = vmatprep.subr.mxu0 0.0
    %173 = vmatpush1.msra.mxu0 %v136
    %174 = vmatprep.subr.mxu0 0.0
    %175 = vmatpush1.msra.mxu0 %v135
    %176 = vmatprep.subr.mxu0 0.0
    %177 = vmatpush1.msra.mxu0 %v134
    %178 = vmatprep.subr.mxu0 0.0
    %179 = vmatpush1.msra.mxu0 %v133
    %180 = vmatprep.subr.mxu0 0.0
    %181 = vmatpush2.msra.mxu0 0.0
    %182 = vmatprep.subr.mxu0 0.0
    %183 = vmatpush2.msra.mxu0 0.0
    %184 = vmatprep.subr.mxu0 0.0
    %185 = vmatpush2.msra.mxu0 0.0
    %186 = vmatprep.subr.mxu0 0.0
    %187 = vmatpush2.msra.mxu0 0.0
    %188 = vmatprep.subr.mxu0 0.0
    %189 = vmatpush2.msra.mxu0 0.0
    %190 = vmatprep.subr.mxu0 0.0
    %191 = vmatpush2.msra.mxu0 0.0
    %192 = vmatprep.subr.mxu0 0.0
    %193 = vmatpush2.msra.mxu0 0.0
    %194 = vmatprep.subr.mxu0 0.0
    %195 = vmatpush2.msra.mxu0 0.0
    %196 = vmatprep.subr.mxu0 0.0
    %197 = vmatpush2.msra.mxu0 0.0
    %198 = vmatprep.subr.mxu0 0.0
    %199 = vmatpush2.msra.mxu0 0.0
    %200 = vmatprep.subr.mxu0 0.0
    %201 = vmatpush2.msra.mxu0 0.0
    %202 = vmatprep.subr.mxu0 0.0
    %203 = vmatpush2.msra.mxu0 0.0
    %204 = vmatprep.subr.mxu0 0.0
    %205 = vmatpush2.msra.mxu0 0.0
    %206 = vmatprep.subr.mxu0 0.0
    %207 = vmatpush2.msra.mxu0 0.0
    %208 = vmatprep.subr.mxu0 0.0
    %209 = vmatpush2.msra.mxu0 0.0
    %210 = vmatprep.subr.mxu0 0.0
    %211 = vmatpush2.msra.mxu0 0.0
    %212 = vmatprep.mubr.f32.mxu0 0.0
    %213 = vmatmul.mubr.f32.gmra.mxu0 %v146
    %v214 = vpop.f32.mrf.mxu0
    %v215 = vadd.f32 %v142, %v214
    %v216 = vpop.f32.mrf.mxu0
    %217 = vdwg.mxu0
    %v218 = vld [vmem:[#allocation5] sm:$0xff]
    %v219 = vld [vmem:[#allocation8] sm:$0xff]
    %v220 = vld [vmem:[#allocation8 + $0x8] sm:$0xff]
    %v221 = vld [vmem:[#allocation8 + $0x10] sm:$0xff]
    %v222 = vld [vmem:[#allocation8 + $0x18] sm:$0xff]
    %v223 = vld [vmem:[%s5] sm:$0x1]
    %v225 = vlaneseq
    %v226 = vshrl.u32 %v225, 7
    %v227 = vsub.s32 0, %v226
    %v228 = vrot.slane %v223, %v227
    %v231 = vsel %vm144, %v218, 0
    %233 = vmatprep.subr.mxu0 0.0
    %234 = vmatpush1.msra.mxu0 0.0
    %235 = vmatprep.subr.mxu0 0.0
    %236 = vmatpush1.msra.mxu0 0.0
    %237 = vmatprep.subr.mxu0 0.0
    %238 = vmatpush1.msra.mxu0 0.0
    %239 = vmatprep.subr.mxu0 0.0
    %240 = vmatpush1.msra.mxu0 0.0
    %241 = vmatprep.subr.mxu0 0.0
    %242 = vmatpush1.msra.mxu0 0.0
    %243 = vmatprep.subr.mxu0 0.0
    %244 = vmatpush1.msra.mxu0 0.0
    %245 = vmatprep.subr.mxu0 0.0
    %246 = vmatpush1.msra.mxu0 0.0
    %247 = vmatprep.subr.mxu0 0.0
    %248 = vmatpush1.msra.mxu0 0.0
    %249 = vmatprep.subr.mxu0 0.0
    %250 = vmatpush1.msra.mxu0 0.0
    %251 = vmatprep.subr.mxu0 0.0
    %252 = vmatpush1.msra.mxu0 0.0
    %253 = vmatprep.subr.mxu0 0.0
    %254 = vmatpush1.msra.mxu0 0.0
    %255 = vmatprep.subr.mxu0 0.0
    %256 = vmatpush1.msra.mxu0 0.0
    %257 = vmatprep.subr.mxu0 0.0
    %258 = vmatpush1.msra.mxu0 %v222
    %259 = vmatprep.subr.mxu0 0.0
    %260 = vmatpush1.msra.mxu0 %v221
    %261 = vmatprep.subr.mxu0 0.0
    %262 = vmatpush1.msra.mxu0 %v220
    %263 = vmatprep.subr.mxu0 0.0
    %264 = vmatpush1.msra.mxu0 %v219
    %265 = vmatprep.subr.mxu0 0.0
    %266 = vmatpush2.msra.mxu0 0.0
    %267 = vmatprep.subr.mxu0 0.0
    %268 = vmatpush2.msra.mxu0 0.0
    %269 = vmatprep.subr.mxu0 0.0
    %270 = vmatpush2.msra.mxu0 0.0
    %271 = vmatprep.subr.mxu0 0.0
    %272 = vmatpush2.msra.mxu0 0.0
    %273 = vmatprep.subr.mxu0 0.0
    %274 = vmatpush2.msra.mxu0 0.0
    %275 = vmatprep.subr.mxu0 0.0
    %276 = vmatpush2.msra.mxu0 0.0
    %277 = vmatprep.subr.mxu0 0.0
    %278 = vmatpush2.msra.mxu0 0.0
    %279 = vmatprep.subr.mxu0 0.0
    %280 = vmatpush2.msra.mxu0 0.0
    %281 = vmatprep.subr.mxu0 0.0
    %282 = vmatpush2.msra.mxu0 0.0
    %283 = vmatprep.subr.mxu0 0.0
    %284 = vmatpush2.msra.mxu0 0.0
    %285 = vmatprep.subr.mxu0 0.0
    %286 = vmatpush2.msra.mxu0 0.0
    %287 = vmatprep.subr.mxu0 0.0
    %288 = vmatpush2.msra.mxu0 0.0
    %289 = vmatprep.subr.mxu0 0.0
    %290 = vmatpush2.msra.mxu0 0.0
    %291 = vmatprep.subr.mxu0 0.0
    %292 = vmatpush2.msra.mxu0 0.0
    %293 = vmatprep.subr.mxu0 0.0
    %294 = vmatpush2.msra.mxu0 0.0
    %295 = vmatprep.subr.mxu0 0.0
    %296 = vmatpush2.msra.mxu0 0.0
    %297 = vmatprep.mubr.f32.mxu0 0.0
    %298 = vmatmul.mubr.f32.gmra.mxu0 %v231
    %v299 = vpop.f32.mrf.mxu0
    %v300 = vadd.f32 %v228, %v299
    %v301 = vpop.f32.mrf.mxu0
    %302 = vdwg.mxu0
    %v303 = vld [vmem:[#allocation10] sm:$0xff]
    %v304 = vld [vmem:[#allocation10 + $0x8] sm:$0xff]
    %v305 = vld [vmem:[#allocation10 + $0x10] sm:$0xff]
    %v306 = vld [vmem:[#allocation10 + $0x18] sm:$0xff]
    %v307 = vld [vmem:[%s7] sm:$0x1]
    %v309 = vlaneseq
    %v310 = vshrl.u32 %v309, 7
    %v311 = vsub.s32 0, %v310
    %v312 = vrot.slane %v307, %v311
    %314 = vmatprep.subr.mxu0 0.0
    %315 = vmatpush1.msra.mxu0 0.0
    %316 = vmatprep.subr.mxu0 0.0
    %317 = vmatpush1.msra.mxu0 0.0
    %318 = vmatprep.subr.mxu0 0.0
    %319 = vmatpush1.msra.mxu0 0.0
    %320 = vmatprep.subr.mxu0 0.0
    %321 = vmatpush1.msra.mxu0 0.0
    %322 = vmatprep.subr.mxu0 0.0
    %323 = vmatpush1.msra.mxu0 0.0
    %324 = vmatprep.subr.mxu0 0.0
    %325 = vmatpush1.msra.mxu0 0.0
    %326 = vmatprep.subr.mxu0 0.0
    %327 = vmatpush1.msra.mxu0 0.0
    %328 = vmatprep.subr.mxu0 0.0
    %329 = vmatpush1.msra.mxu0 0.0
    %330 = vmatprep.subr.mxu0 0.0
    %331 = vmatpush1.msra.mxu0 0.0
    %332 = vmatprep.subr.mxu0 0.0
    %333 = vmatpush1.msra.mxu0 0.0
    %334 = vmatprep.subr.mxu0 0.0
    %335 = vmatpush1.msra.mxu0 0.0
    %336 = vmatprep.subr.mxu0 0.0
    %337 = vmatpush1.msra.mxu0 0.0
    %338 = vmatprep.subr.mxu0 0.0
    %339 = vmatpush1.msra.mxu0 %v306
    %340 = vmatprep.subr.mxu0 0.0
    %341 = vmatpush1.msra.mxu0 %v305
    %342 = vmatprep.subr.mxu0 0.0
    %343 = vmatpush1.msra.mxu0 %v304
    %344 = vmatprep.subr.mxu0 0.0
    %345 = vmatpush1.msra.mxu0 %v303
    %346 = vmatprep.subr.mxu0 0.0
    %347 = vmatpush2.msra.mxu0 0.0
    %348 = vmatprep.subr.mxu0 0.0
    %349 = vmatpush2.msra.mxu0 0.0
    %350 = vmatprep.subr.mxu0 0.0
    %351 = vmatpush2.msra.mxu0 0.0
    %352 = vmatprep.subr.mxu0 0.0
    %353 = vmatpush2.msra.mxu0 0.0
    %354 = vmatprep.subr.mxu0 0.0
    %355 = vmatpush2.msra.mxu0 0.0
    %356 = vmatprep.subr.mxu0 0.0
    %357 = vmatpush2.msra.mxu0 0.0
    %358 = vmatprep.subr.mxu0 0.0
    %359 = vmatpush2.msra.mxu0 0.0
    %360 = vmatprep.subr.mxu0 0.0
    %361 = vmatpush2.msra.mxu0 0.0
    %362 = vmatprep.subr.mxu0 0.0
    %363 = vmatpush2.msra.mxu0 0.0
    %364 = vmatprep.subr.mxu0 0.0
    %365 = vmatpush2.msra.mxu0 0.0
    %366 = vmatprep.subr.mxu0 0.0
    %367 = vmatpush2.msra.mxu0 0.0
    %368 = vmatprep.subr.mxu0 0.0
    %369 = vmatpush2.msra.mxu0 0.0
    %370 = vmatprep.subr.mxu0 0.0
    %371 = vmatpush2.msra.mxu0 0.0
    %372 = vmatprep.subr.mxu0 0.0
    %373 = vmatpush2.msra.mxu0 0.0
    %374 = vmatprep.subr.mxu0 0.0
    %375 = vmatpush2.msra.mxu0 0.0
    %376 = vmatprep.subr.mxu0 0.0
    %377 = vmatpush2.msra.mxu0 0.0
    %378 = vmatprep.mubr.f32.mxu0 0.0
    %379 = vmatmul.mubr.f32.gmra.mxu0 %v231
    %v380 = vpop.f32.mrf.mxu0
    %v381 = vadd.f32 %v312, %v380
    %v382 = vpop.f32.mrf.mxu0
    %383 = vdwg.mxu0
    %v384 = vld [vmem:[#allocation14] sm:$0x1]
    %v385 = vmul.f32 %v215, %v215
    %386 = vadd.xlane.f32.xlu0 %v385
    %v387 = vpop.xlane.xlu0 %386
    %v388 = vrot.slane %v387, 4
    %v389 = vadd.f32 %v387, %v388
    %v390 = vrot.slane %v389, 2
    %v391 = vadd.f32 %v389, %v390
    %v392 = vrot.slane %v391, 1
    %v393 = vadd.f32 %v391, %v392
    %s394 = vtos %v393
    %v395 = vstv %s394
    %v396 = vadd.f32 %v384, %v395
    %vm397 = vcmask 0
    %398 = vst.msk [vmem:[#allocation14] sm:$0x1] %vm397, %v396
    %v399 = vld [vmem:[#allocation15] sm:$0x1]
    %v400 = vmul.f32 %v300, %v300
    %401 = vadd.xlane.f32.xlu0 %v400
    %v402 = vpop.xlane.xlu0 %401
    %v403 = vrot.slane %v402, 4
    %v404 = vadd.f32 %v402, %v403
    %v405 = vrot.slane %v404, 2
    %v406 = vadd.f32 %v404, %v405
    %v407 = vrot.slane %v406, 1
    %v408 = vadd.f32 %v406, %v407
    %s409 = vtos %v408
    %v410 = vstv %s409
    %v411 = vadd.f32 %v399, %v410
    %412 = vst.msk [vmem:[#allocation15] sm:$0x1] %vm397, %v411
    %v413 = vld [vmem:[#allocation12] sm:$0x1]
    %v414 = vrot.slane %v300, 4
    %v415 = vadd.f32 %v300, %v414
    %v416 = vrot.slane %v415, 2
    %v417 = vadd.f32 %v415, %v416
    %v418 = vrot.slane %v417, 1
    %v419 = vadd.f32 %v417, %v418
    %v420 = vadd.f32 %v413, %v419
    %421 = vst [vmem:[#allocation12] sm:$0x1] %v420
    %v422 = vld [vmem:[#allocation11] sm:$0xff]
    %v423 = vld [vmem:[#allocation11 + $0x8] sm:$0xff]
    %v424 = vld [vmem:[#allocation11 + $0x10] sm:$0xff]
    %v425 = vld [vmem:[#allocation11 + $0x18] sm:$0xff]
    %v426 = vld [vmem:[#allocation11 + $0x20] sm:$0xff]
    %v427 = vld [vmem:[#allocation11 + $0x28] sm:$0xff]
    %v428 = vld [vmem:[#allocation11 + $0x30] sm:$0xff]
    %v429 = vld [vmem:[#allocation11 + $0x38] sm:$0xff]
    %v430 = vld [vmem:[#allocation11 + $0x40] sm:$0xff]
    %v431 = vld [vmem:[#allocation11 + $0x48] sm:$0xff]
    %v432 = vld [vmem:[#allocation11 + $0x50] sm:$0xff]
    %v433 = vld [vmem:[#allocation11 + $0x58] sm:$0xff]
    %v434 = vld [vmem:[#allocation11 + $0x60] sm:$0xff]
    %v435 = vld [vmem:[#allocation11 + $0x68] sm:$0xff]
    %v436 = vld [vmem:[#allocation11 + $0x70] sm:$0xff]
    %v437 = vld [vmem:[#allocation11 + $0x78] sm:$0xff]
    %438 = vxpose.xlu0.b32.start [1/16] %v300, 128
    %439 = vxpose.xlu0.b32.cont [2/16] 0.0, 128
    %440 = vxpose.xlu0.b32.cont [3/16] 0.0, 128
    %441 = vxpose.xlu0.b32.cont [4/16] 0.0, 128
    %442 = vxpose.xlu0.b32.cont [5/16] 0.0, 128
    %443 = vxpose.xlu0.b32.cont [6/16] 0.0, 128
    %444 = vxpose.xlu0.b32.cont [7/16] 0.0, 128
    %445 = vxpose.xlu0.b32.cont [8/16] 0.0, 128
    %446 = vxpose.xlu0.b32.cont [9/16] 0.0, 128
    %447 = vxpose.xlu0.b32.cont [10/16] 0.0, 128
    %448 = vxpose.xlu0.b32.cont [11/16] 0.0, 128
    %449 = vxpose.xlu0.b32.cont [12/16] 0.0, 128
    %450 = vxpose.xlu0.b32.cont [13/16] 0.0, 128
    %451 = vxpose.xlu0.b32.cont [14/16] 0.0, 128
    %452 = vxpose.xlu0.b32.cont [15/16] 0.0, 128
    %453 = vxpose.xlu0.b32.end [16/16] 0.0, 128
    %v454 = vpop.trf.xlu0
    %v455 = vpop.trf.xlu0
    %v456 = vpop.trf.xlu0
    %v457 = vpop.trf.xlu0
    %v458 = vpop.trf.xlu0
    %v459 = vpop.trf.xlu0
    %v460 = vpop.trf.xlu0
    %v461 = vpop.trf.xlu0
    %v462 = vpop.trf.xlu0
    %v463 = vpop.trf.xlu0
    %v464 = vpop.trf.xlu0
    %v465 = vpop.trf.xlu0
    %v466 = vpop.trf.xlu0
    %v467 = vpop.trf.xlu0
    %v468 = vpop.trf.xlu0
    %v469 = vpop.trf.xlu0
    %vm470 = vcmask 64512
    %v472 = vsel %vm470, %v454, 0
    %v475 = vsel %vm470, %v455, 0
    %v478 = vsel %vm470, %v456, 0
    %v481 = vsel %vm470, %v457, 0
    %v484 = vsel %vm470, %v458, 0
    %v487 = vsel %vm470, %v459, 0
    %v490 = vsel %vm470, %v460, 0
    %v493 = vsel %vm470, %v461, 0
    %v496 = vsel %vm470, %v462, 0
    %v499 = vsel %vm470, %v463, 0
    %v502 = vsel %vm470, %v464, 0
    %v505 = vsel %vm470, %v465, 0
    %v508 = vsel %vm470, %v466, 0
    %v511 = vsel %vm470, %v467, 0
    %v514 = vsel %vm470, %v468, 0
    %v517 = vsel %vm470, %v469, 0
    %519 = vmatprep.subr.mxu0 0.0
    %520 = vmatpush1.msra.mxu0 0.0
    %521 = vmatprep.subr.mxu0 0.0
    %522 = vmatpush1.msra.mxu0 0.0
    %523 = vmatprep.subr.mxu0 0.0
    %524 = vmatpush1.msra.mxu0 0.0
    %525 = vmatprep.subr.mxu0 0.0
    %526 = vmatpush1.msra.mxu0 0.0
    %527 = vmatprep.subr.mxu0 0.0
    %528 = vmatpush1.msra.mxu0 0.0
    %529 = vmatprep.subr.mxu0 0.0
    %530 = vmatpush1.msra.mxu0 0.0
    %531 = vmatprep.subr.mxu0 0.0
    %532 = vmatpush1.msra.mxu0 0.0
    %533 = vmatprep.subr.mxu0 0.0
    %534 = vmatpush1.msra.mxu0 0.0
    %535 = vmatprep.subr.mxu0 0.0
    %536 = vmatpush1.msra.mxu0 0.0
    %537 = vmatprep.subr.mxu0 0.0
    %538 = vmatpush1.msra.mxu0 0.0
    %539 = vmatprep.subr.mxu0 0.0
    %540 = vmatpush1.msra.mxu0 0.0
    %541 = vmatprep.subr.mxu0 0.0
    %542 = vmatpush1.msra.mxu0 0.0
    %543 = vmatprep.subr.mxu0 0.0
    %544 = vmatpush1.msra.mxu0 0.0
    %545 = vmatprep.subr.mxu0 0.0
    %546 = vmatpush1.msra.mxu0 0.0
    %547 = vmatprep.subr.mxu0 0.0
    %548 = vmatpush1.msra.mxu0 0.0
    %549 = vmatprep.subr.mxu0 0.0
    %550 = vmatpush1.msra.mxu0 %v381
    %551 = vmatprep.subr.mxu0 0.0
    %552 = vmatpush2.msra.mxu0 0.0
    %553 = vmatprep.subr.mxu0 0.0
    %554 = vmatpush2.msra.mxu0 0.0
    %555 = vmatprep.subr.mxu0 0.0
    %556 = vmatpush2.msra.mxu0 0.0
    %557 = vmatprep.subr.mxu0 0.0
    %558 = vmatpush2.msra.mxu0 0.0
    %559 = vmatprep.subr.mxu0 0.0
    %560 = vmatpush2.msra.mxu0 0.0
    %561 = vmatprep.subr.mxu0 0.0
    %562 = vmatpush2.msra.mxu0 0.0
    %563 = vmatprep.subr.mxu0 0.0
    %564 = vmatpush2.msra.mxu0 0.0
    %565 = vmatprep.subr.mxu0 0.0
    %566 = vmatpush2.msra.mxu0 0.0
    %567 = vmatprep.subr.mxu0 0.0
    %568 = vmatpush2.msra.mxu0 0.0
    %569 = vmatprep.subr.mxu0 0.0
    %570 = vmatpush2.msra.mxu0 0.0
    %571 = vmatprep.subr.mxu0 0.0
    %572 = vmatpush2.msra.mxu0 0.0
    %573 = vmatprep.subr.mxu0 0.0
    %574 = vmatpush2.msra.mxu0 0.0
    %575 = vmatprep.subr.mxu0 0.0
    %576 = vmatpush2.msra.mxu0 0.0
    %577 = vmatprep.subr.mxu0 0.0
    %578 = vmatpush2.msra.mxu0 0.0
    %579 = vmatprep.subr.mxu0 0.0
    %580 = vmatpush2.msra.mxu0 0.0
    %581 = vmatprep.subr.mxu0 0.0
    %582 = vmatpush2.msra.mxu0 0.0
    %583 = vmatprep.mubr.f32.mxu0 0.0
    %584 = vmatmul.mubr.f32.gmra.mxu0 %v472
    %v585 = vpop.f32.mrf.mxu0
    %v586 = vadd.f32 0.0, %v585
    %v587 = vpop.f32.mrf.mxu0
    %588 = vmatprep.mubr.f32.mxu0 0.0
    %589 = vmatmul.mubr.f32.gmra.mxu0 %v475
    %v590 = vpop.f32.mrf.mxu0
    %v591 = vadd.f32 0.0, %v590
    %v592 = vpop.f32.mrf.mxu0
    %593 = vmatprep.mubr.f32.mxu0 0.0
    %594 = vmatmul.mubr.f32.gmra.mxu0 %v478
    %v595 = vpop.f32.mrf.mxu0
    %v596 = vadd.f32 0.0, %v595
    %v597 = vpop.f32.mrf.mxu0
    %598 = vmatprep.mubr.f32.mxu0 0.0
    %599 = vmatmul.mubr.f32.gmra.mxu0 %v481
    %v600 = vpop.f32.mrf.mxu0
    %v601 = vadd.f32 0.0, %v600
    %v602 = vpop.f32.mrf.mxu0
    %603 = vmatprep.mubr.f32.mxu0 0.0
    %604 = vmatmul.mubr.f32.gmra.mxu0 %v484
    %v605 = vpop.f32.mrf.mxu0
    %v606 = vadd.f32 0.0, %v605
    %v607 = vpop.f32.mrf.mxu0
    %608 = vmatprep.mubr.f32.mxu0 0.0
    %609 = vmatmul.mubr.f32.gmra.mxu0 %v487
    %v610 = vpop.f32.mrf.mxu0
    %v611 = vadd.f32 0.0, %v610
    %v612 = vpop.f32.mrf.mxu0
    %613 = vmatprep.mubr.f32.mxu0 0.0
    %614 = vmatmul.mubr.f32.gmra.mxu0 %v490
    %v615 = vpop.f32.mrf.mxu0
    %v616 = vadd.f32 0.0, %v615
    %v617 = vpop.f32.mrf.mxu0
    %618 = vmatprep.mubr.f32.mxu0 0.0
    %619 = vmatmul.mubr.f32.gmra.mxu0 %v493
    %v620 = vpop.f32.mrf.mxu0
    %v621 = vadd.f32 0.0, %v620
    %v622 = vpop.f32.mrf.mxu0
    %623 = vmatprep.mubr.f32.mxu0 0.0
    %624 = vmatmul.mubr.f32.gmra.mxu0 %v496
    %v625 = vpop.f32.mrf.mxu0
    %v626 = vadd.f32 0.0, %v625
    %v627 = vpop.f32.mrf.mxu0
    %628 = vmatprep.mubr.f32.mxu0 0.0
    %629 = vmatmul.mubr.f32.gmra.mxu0 %v499
    %v630 = vpop.f32.mrf.mxu0
    %v631 = vadd.f32 0.0, %v630
    %v632 = vpop.f32.mrf.mxu0
    %633 = vmatprep.mubr.f32.mxu0 0.0
    %634 = vmatmul.mubr.f32.gmra.mxu0 %v502
    %v635 = vpop.f32.mrf.mxu0
    %v636 = vadd.f32 0.0, %v635
    %v637 = vpop.f32.mrf.mxu0
    %638 = vmatprep.mubr.f32.mxu0 0.0
    %639 = vmatmul.mubr.f32.gmra.mxu0 %v505
    %v640 = vpop.f32.mrf.mxu0
    %v641 = vadd.f32 0.0, %v640
    %v642 = vpop.f32.mrf.mxu0
    %643 = vmatprep.mubr.f32.mxu0 0.0
    %644 = vmatmul.mubr.f32.gmra.mxu0 %v508
    %v645 = vpop.f32.mrf.mxu0
    %v646 = vadd.f32 0.0, %v645
    %v647 = vpop.f32.mrf.mxu0
    %648 = vmatprep.mubr.f32.mxu0 0.0
    %649 = vmatmul.mubr.f32.gmra.mxu0 %v511
    %v650 = vpop.f32.mrf.mxu0
    %v651 = vadd.f32 0.0, %v650
    %v652 = vpop.f32.mrf.mxu0
    %653 = vmatprep.mubr.f32.mxu0 0.0
    %654 = vmatmul.mubr.f32.gmra.mxu0 %v514
    %v655 = vpop.f32.mrf.mxu0
    %v656 = vadd.f32 0.0, %v655
    %v657 = vpop.f32.mrf.mxu0
    %658 = vmatprep.mubr.f32.mxu0 0.0
    %659 = vmatmul.mubr.f32.gmra.mxu0 %v517
    %v660 = vpop.f32.mrf.mxu0
    %v661 = vadd.f32 0.0, %v660
    %v662 = vpop.f32.mrf.mxu0
    %663 = vdwg.mxu0
    %v664 = vadd.f32 %v422, %v586
    %v665 = vadd.f32 %v423, %v591
    %v666 = vadd.f32 %v424, %v596
    %v667 = vadd.f32 %v425, %v601
    %v668 = vadd.f32 %v426, %v606
    %v669 = vadd.f32 %v427, %v611
    %v670 = vadd.f32 %v428, %v616
    %v671 = vadd.f32 %v429, %v621
    %v672 = vadd.f32 %v430, %v626
    %v673 = vadd.f32 %v431, %v631
    %v674 = vadd.f32 %v432, %v636
    %v675 = vadd.f32 %v433, %v641
    %v676 = vadd.f32 %v434, %v646
    %v677 = vadd.f32 %v435, %v651
    %v678 = vadd.f32 %v436, %v656
    %v679 = vadd.f32 %v437, %v661
    %680 = vst [vmem:[#allocation11] sm:$0xff] %v664
    %681 = vst [vmem:[#allocation11 + $0x8] sm:$0xff] %v665
    %682 = vst [vmem:[#allocation11 + $0x10] sm:$0xff] %v666
    %683 = vst [vmem:[#allocation11 + $0x18] sm:$0xff] %v667
    %684 = vst [vmem:[#allocation11 + $0x20] sm:$0xff] %v668
    %685 = vst [vmem:[#allocation11 + $0x28] sm:$0xff] %v669
    %686 = vst [vmem:[#allocation11 + $0x30] sm:$0xff] %v670
    %687 = vst [vmem:[#allocation11 + $0x38] sm:$0xff] %v671
    %688 = vst [vmem:[#allocation11 + $0x40] sm:$0xff] %v672
    %689 = vst [vmem:[#allocation11 + $0x48] sm:$0xff] %v673
    %690 = vst [vmem:[#allocation11 + $0x50] sm:$0xff] %v674
    %691 = vst [vmem:[#allocation11 + $0x58] sm:$0xff] %v675
    %692 = vst [vmem:[#allocation11 + $0x60] sm:$0xff] %v676
    %693 = vst [vmem:[#allocation11 + $0x68] sm:$0xff] %v677
    %694 = vst [vmem:[#allocation11 + $0x70] sm:$0xff] %v678
    %695 = vst [vmem:[#allocation11 + $0x78] sm:$0xff] %v679
    // Predicated region
    $region58: #{tpu_custom_call.1} parent=1 // pred_check
      _
    $region59: #{tpu_custom_call.1} parent=1 // pred_check_branch
      %697 = sbr.rel (0) target = $region61
    $region60: #{tpu_custom_call.1} parent=1 // pred_region
      %s699 = ssub.s32 2048, 2048
      %700 = vsyncadd [#allocation4], %s699
      %s701 = sshll.u32 [#allocation11], 4
      %s702 = int_to_ptr.vmem [resolvable:$true] %s701
      %707 = dma.vmem_to_hbm [thread:$0]  %s702, 2048, %s8, [#allocation4], 128, 128, 8
    $region61: #{tpu_custom_call.1} parent=1 // pred_fallthru
      _
    // Predicated region
    $region62: #{tpu_custom_call.1} parent=1 // pred_check
      _
    $region63: #{tpu_custom_call.1} parent=1 // pred_check_branch
      %709 = sbr.rel (0) target = $region65
    $region64: #{tpu_custom_call.1} parent=1 // pred_region
      %s711 = ssub.s32 16, 16
      %712 = vsyncadd [#allocation13], %s711
      %s714 = sshll.u32 [#allocation12], 4
      %s715 = int_to_ptr.vmem [resolvable:$true] %s714
      %717 = dma.vmem_to_hbm [thread:$0]  %s715, 16, %s9, [#allocation13]
    $region65: #{tpu_custom_call.1} parent=1 // pred_fallthru
      _
    // Predicated region
    $region66: #{tpu_custom_call.1} parent=1 // pred_check
      _
    $region67: #{tpu_custom_call.1} parent=1 // pred_check_branch
      %719 = sbr.rel (0) target = $region69
    $region68: #{tpu_custom_call.1} parent=1 // pred_region
      %s721 = ssub.s32 16, 16
      %722 = vsyncadd [#allocation13], %s721
      %s724 = sshll.u32 [#allocation14], 4
      %s725 = int_to_ptr.vmem [resolvable:$true] %s724
      %727 = dma.vmem_to_hbm [thread:$0]  %s725, 16, %s10, [#allocation13]
    $region69: #{tpu_custom_call.1} parent=1 // pred_fallthru
      _
    // Predicated region
    $region70: #{tpu_custom_call.1} parent=1 // pred_check
      _
    $region71: #{tpu_custom_call.1} parent=1 // pred_check_branch
      %729 = sbr.rel (0) target = $region73
    $region72: #{tpu_custom_call.1} parent=1 // pred_region
      %s731 = ssub.s32 16, 16
      %732 = vsyncadd [#allocation16], %s731
      %s734 = sshll.u32 [#allocation15], 4
      %s735 = int_to_ptr.vmem [resolvable:$true] %s734
      %737 = dma.vmem_to_hbm [thread:$0]  %s735, 16, %s11, [#allocation16]
    $region73: #{tpu_custom_call.1} parent=1 // pred_fallthru
      _
    // Predicated region
    $region74: #{tpu_custom_call.1} parent=1 // pred_check
      _
    $region75: #{tpu_custom_call.1} parent=1 // pred_check_branch
      %739 = sbr.rel (0) target = $region77
    $region76: #{tpu_custom_call.1} parent=1 // pred_region
      %740 = dma.done [#allocation4], 2048
    $region77: #{tpu_custom_call.1} parent=1 // pred_fallthru
      _
    // Predicated region
    $region78: #{tpu_custom_call.1} parent=1 // pred_check
      _
    $region79: #{tpu_custom_call.1} parent=1 // pred_check_branch
      %742 = sbr.rel (0) target = $region81
    $region80: #{tpu_custom_call.1} parent=1 // pred_region
      %743 = dma.done [#allocation13], 16
    $region81: #{tpu_custom_call.1} parent=1 // pred_fallthru
      _
    // Predicated region
    $region82: #{tpu_custom_call.1} parent=1 // pred_check
      _
    $region83: #{tpu_custom_call.1} parent=1 // pred_check_branch
      %745 = sbr.rel (0) target = $region85
    $region84: #{tpu_custom_call.1} parent=1 // pred_region
      %746 = dma.done [#allocation13], 16
    $region85: #{tpu_custom_call.1} parent=1 // pred_fallthru
      _
    // Predicated region
    $region86: #{tpu_custom_call.1} parent=1 // pred_check
      _
    $region87: #{tpu_custom_call.1} parent=1 // pred_check_branch
      %748 = sbr.rel (0) target = $region89
    $region88: #{tpu_custom_call.1} parent=1 // pred_region
      %749 = dma.done [#allocation16], 16
    $region89: #{tpu_custom_call.1} parent=1 // pred_fallthru
      _
    %750 = vsyncpa [#allocation3], 1
    %751 = vsyncpa [#allocation6], 1
    %752 = vsyncpa [#allocation9], 1
    %753 = vsyncpa [#allocation4], 1
    %754 = vsyncpa [#allocation13], 1
    %755 = vsyncpa [#allocation16], 1

</llo_original>
